<compile_context>
chip_gen: v6e
topology: v6e:2x2x1
jax: 0.10.0
libtpu: 0.0.40
codegen_flags: <defaults>
</compile_context>

<pallas_src>
import functools
from math import sqrt

import jax
import jax.numpy as jnp
from jax.experimental import pallas as pl
from jax.experimental.pallas import tpu as pltpu


def _round_up(x, m):
    return ((x + m - 1) // m) * m


def _vmem_cap_bytes():
    # ~75% of physical VMEM when discoverable (leaves Mosaic headroom); else a
    # conservative 48 MiB, which is safe on v7x (64 MiB/TC) and fine on v5e/v6e.
    try:
        return int(0.75 * pltpu.get_tpu_info().vmem_capacity_bytes)
    except Exception:
        return 48 * 1024 * 1024


def _row_mult(*dtypes):
    """Sublane-packing multiple for the row tile, across all involved dtypes."""
    m = 8
    for dt in dtypes:
        isz = jnp.dtype(dt).itemsize
        m = max(m, {4: 8, 2: 16, 1: 32}.get(isz, 8))
    return m


def _ffn_kernel_single(x_ref, w1_ref, b1_ref, w2_ref, b2_ref, o_ref):
    """y = leaky_relu(x @ W1 + b1, 0.2) @ W2 + b2 — whole hidden dim in one slab."""
    xb = x_ref[...].astype(w1_ref.dtype)                 # per-tile cast in VMEM
    h = jnp.dot(xb, w1_ref[...], preferred_element_type=jnp.float32)
    h = h + b1_ref[...].astype(jnp.float32)
    h = jnp.maximum(h, 0.2 * h)                          # LeakyReLU(0.2), f32 VPU
    y = jnp.dot(h.astype(w2_ref.dtype), w2_ref[...],
                preferred_element_type=jnp.float32)
    o_ref[...] = (y + b2_ref[...].astype(jnp.float32)).astype(o_ref.dtype)


def _ffn_kernel_tiled(x_ref, w1_ref, b1_ref, w2_ref, b2_ref, o_ref, acc_ref):
    """Hidden dim tiled on grid axis 1; f32 accumulator in VMEM scratch."""
    k = pl.program_id(1)
    xb = x_ref[...].astype(w1_ref.dtype)
    h = jnp.dot(xb, w1_ref[...], preferred_element_type=jnp.float32)
    h = h + b1_ref[...].astype(jnp.float32)
    h = jnp.maximum(h, 0.2 * h)
    contrib = jnp.dot(h.astype(w2_ref.dtype), w2_ref[...],
                      preferred_element_type=jnp.float32)

    @pl.when(k == 0)
    def _():
        acc_ref[...] = contrib                           # first slab: write (no zero-init)

    @pl.when(k > 0)
    def _():
        acc_ref[...] += contrib

    @pl.when(k == pl.num_programs(1) - 1)
    def _():
        o_ref[...] = (acc_ref[...] + b2_ref[...].astype(jnp.float32)).astype(o_ref.dtype)


@functools.partial(jax.jit, static_argnames=("tm", "th", "compute_dtype"))
def feedforward(x, w1, b1, w2, b2, *, tm=512, th=2048, compute_dtype="bfloat16"):
    """x: (..., D_in). w1: (D_in, H), b1: (H,), w2: (H, D_out), b2: (D_out,).

    Returns (..., D_out). compute_dtype sets the MXU operand dtype (default
    bfloat16; accumulation always f32); "float32" gives the exact path.
    """
    *lead, D_in = x.shape
    H = w1.shape[1]
    D_out = w2.shape[1]
    M = 1
    for d in lead:
        M *= d

    cdt = jnp.dtype(compute_dtype) if compute_dtype is not None else x.dtype
    out_dtype = x.dtype

    # x stays in its native dtype & shape in HBM — reshape is free, no pad, no
    # wrapper-side cast pass; the kernel casts each tile in VMEM.
    x2d = x.reshape(M, D_in)

    # Row tile (dtype-aware sublane multiple). Block dim == full array dim is
    # always legal, so small M never needs padding.
    row_mult = _row_mult(x.dtype, cdt, out_dtype)
    tm_req = max(_round_up(tm, row_mult), row_mult)
    if M <= tm_req:
        tm_eff, grid_m = M, 1
    else:
        tm_eff = tm_req
        grid_m = pl.cdiv(M, tm_eff)      # ragged last tile: OOB writes are masked

    # Hidden-dim slab. Common TemporalBlock case: H fits in one slab -> no
    # padding anywhere, no accumulator, weights stay resident across row tiles.
    single_slab = H <= max(th, 128)
    if single_slab:
        th_eff, grid_h = H, 1
        w1_p = w1.astype(cdt)
        b1_p = b1.reshape(1, H)
        w2_p = w2.astype(cdt)
    else:
        th_eff = _round_up(min(th, H), 128)
        H_pad = _round_up(H, th_eff)
        grid_h = H_pad // th_eff
        w1_p = jnp.pad(w1, ((0, 0), (0, H_pad - H))).astype(cdt)
        b1_p = jnp.pad(b1, (0, H_pad - H)).reshape(1, H_pad)
        w2_p = jnp.pad(w2, ((0, H_pad - H), (0, 0))).astype(cdt)
    b2_p = b2.reshape(1, D_out)

    # VMEM budget: double-buffered operands/outputs + f32 hidden tile (+ acc).
    it_x = jnp.dtype(x.dtype).itemsize
    it_c = jnp.dtype(cdt).itemsize
    it_o = jnp.dtype(out_dtype).itemsize
    vmem_need = (2 * tm_eff * D_in * it_x
                 + 2 * (D_in * th_eff + th_eff * D_out) * it_c
                 + 2 * (th_eff + D_out) * 4
                 + 2 * tm_eff * D_out * it_o
                 + tm_eff * th_eff * 4
                 + (0 if single_slab else tm_eff * D_out * 4))
    vmem_limit = int(min(max(4 * vmem_need, 32 * 1024 * 1024), _vmem_cap_bytes()))

    if single_slab:
        grid = (grid_m,)
        in_specs = [
            pl.BlockSpec((tm_eff, D_in), lambda i: (i, 0)),    # x rows
            pl.BlockSpec((D_in, H), lambda i: (0, 0)),         # W1 (resident)
            pl.BlockSpec((1, H), lambda i: (0, 0)),            # b1
            pl.BlockSpec((H, D_out), lambda i: (0, 0)),        # W2 (resident)
            pl.BlockSpec((1, D_out), lambda i: (0, 0)),        # b2
        ]
        out_specs = pl.BlockSpec((tm_eff, D_out), lambda i: (i, 0))
        scratch_shapes = []
        kernel = _ffn_kernel_single
        dims = ("parallel",)
    else:
        grid = (grid_m, grid_h)
        in_specs = [
            pl.BlockSpec((tm_eff, D_in), lambda i, k: (i, 0)),
            pl.BlockSpec((D_in, th_eff), lambda i, k: (0, k)),
            pl.BlockSpec((1, th_eff), lambda i, k: (0, k)),
            pl.BlockSpec((th_eff, D_out), lambda i, k: (k, 0)),
            pl.BlockSpec((1, D_out), lambda i, k: (0, 0)),
        ]
        out_specs = pl.BlockSpec((tm_eff, D_out), lambda i, k: (i, 0))
        scratch_shapes = [pltpu.VMEM((tm_eff, D_out), jnp.float32)]
        kernel = _ffn_kernel_tiled
        dims = ("parallel", "arbitrary")

    out2d = pl.pallas_call(
        kernel,
        out_shape=jax.ShapeDtypeStruct((M, D_out), out_dtype),
        grid_spec=pltpu.PrefetchScalarGridSpec(
            num_scalar_prefetch=0,
            grid=grid,
            in_specs=in_specs,
            out_specs=out_specs,
            scratch_shapes=scratch_shapes,
        ),
        compiler_params=pltpu.CompilerParams(
            dimension_semantics=dims,
            vmem_limit_bytes=vmem_limit,
        ),
    )(x2d, w1_p, b1_p, w2_p, b2_p)

    return out2d.reshape(*lead, D_out)


def init_params(key, input_dim, hidden_dim, output_dim):
    """nn.Linear-style U(-1/sqrt(fan_in), 1/sqrt(fan_in)); weights in (in, out) layout."""
    k1, k2, k3, k4 = jax.random.split(key, 4)
    lim1 = 1.0 / sqrt(input_dim)
    lim2 = 1.0 / sqrt(hidden_dim)
    w1 = jax.random.uniform(k1, (input_dim, hidden_dim), jnp.float32, -lim1, lim1)
    b1 = jax.random.uniform(k2, (hidden_dim,), jnp.float32, -lim1, lim1)
    w2 = jax.random.uniform(k3, (hidden_dim, output_dim), jnp.float32, -lim2, lim2)
    b2 = jax.random.uniform(k4, (output_dim,), jnp.float32, -lim2, lim2)
    return w1, b1, w2, b2


if __name__ == "__main__":
    # Shapes consistent with TemporalBlock's input (batch, dim, patch_num, patch_len);
    # the FFN acts on the last axis: patch_len -> hidden_dim -> output_dim.
    B, C, PN, PLEN = 2, 4, 8, 32
    hidden_dim, output_dim = 64, 32

    key = jax.random.PRNGKey(0)
    kx, kp = jax.random.split(key)
    x = jax.random.normal(kx, (B, C, PN, PLEN), jnp.float32)
    w1, b1, w2, b2 = init_params(kp, PLEN, hidden_dim, output_dim)

    # Pure-JAX reference (dropout == identity at inference).
    h_ref = x.reshape(-1, PLEN) @ w1 + b1
    h_ref = jnp.where(h_ref >= 0, h_ref, 0.2 * h_ref)
    y_ref = (h_ref @ w2 + b2).reshape(B, C, PN, output_dim)

    # Exact f32 path.
    out_f32 = jax.block_until_ready(
        feedforward(x, w1, b1, w2, b2, compute_dtype="float32"))
    assert out_f32.shape == (B, C, PN, output_dim)
    assert jnp.allclose(out_f32, y_ref, atol=1e-4, rtol=1e-4), float(
        jnp.max(jnp.abs(out_f32 - y_ref)))

    # Default path: bf16 operands, f32 accumulation (v5e/v6e/v7x friendly).
    out_bf = jax.block_until_ready(feedforward(x, w1, b1, w2, b2))
    assert out_bf.shape == (B, C, PN, output_dim)
    assert jnp.allclose(out_bf, y_ref, atol=5e-2, rtol=5e-2), float(
        jnp.max(jnp.abs(out_bf - y_ref)))

    print("KERNEL_OK")
</pallas_src>

<mosaic_0001>
module attributes {stable_mosaic.version = 11 : i64} {
  func.func @_ffn_kernel_single(%arg0: i32, %arg1: memref<64x32xf32, #tpu.memory_space<vmem>>, %arg2: memref<32x64xf32, #tpu.memory_space<vmem>>, %arg3: memref<1x64xf32, #tpu.memory_space<vmem>>, %arg4: memref<64x32xf32, #tpu.memory_space<vmem>>, %arg5: memref<1x32xf32, #tpu.memory_space<vmem>>, %arg6: memref<64x32xf32, #tpu.memory_space<vmem>>) attributes {dimension_semantics = [#tpu.dimension_semantics<parallel>], iteration_bounds = array<i64: 1>, scalar_prefetch = 0 : i64, scratch_operands = 0 : i64, tpu.core_type = #tpu.core_type<tc>, window_params = [{transform_indices = @transform_0, window_bounds = array<i64: 64, 32>}, {pipeline_mode = #tpu.pipeline_mode<synchronous>, transform_indices = @transform_1, window_bounds = array<i64: 32, 64>}, {pipeline_mode = #tpu.pipeline_mode<synchronous>, transform_indices = @transform_2, window_bounds = array<i64: 1, 64>}, {pipeline_mode = #tpu.pipeline_mode<synchronous>, transform_indices = @transform_3, window_bounds = array<i64: 64, 32>}, {pipeline_mode = #tpu.pipeline_mode<synchronous>, transform_indices = @transform_4, window_bounds = array<i64: 1, 32>}, {transform_indices = @transform_5, window_bounds = array<i64: 64, 32>}]} {
    %c0 = arith.constant 0 : index
    %c0_0 = arith.constant 0 : index
    %0 = vector.load %arg1[%c0, %c0_0] : memref<64x32xf32, #tpu.memory_space<vmem>>, vector<64x32xf32>
    %c0_1 = arith.constant 0 : index
    %c0_2 = arith.constant 0 : index
    %1 = vector.load %arg2[%c0_1, %c0_2] : memref<32x64xf32, #tpu.memory_space<vmem>>, vector<32x64xf32>
    %cst = arith.constant dense<0.000000e+00> : vector<64x64xf32>
    %2 = tpu.matmul %0, %1, %cst {dimension_numbers = #tpu.dot_dimension_numbers<[1], [0], [0], [1], [0, 0, 1, 1], [], []>} : vector<64x32xf32>, vector<32x64xf32>, vector<64x64xf32> -> vector<64x64xf32>
    %c0_3 = arith.constant 0 : index
    %c0_4 = arith.constant 0 : index
    %3 = vector.load %arg3[%c0_3, %c0_4] : memref<1x64xf32, #tpu.memory_space<vmem>>, vector<1x64xf32>
    %4 = vector.broadcast %3 : vector<1x64xf32> to vector<64x64xf32>
    %5 = arith.addf %2, %4 : vector<64x64xf32>
    %cst_5 = arith.constant 2.000000e-01 : f32
    %6 = vector.broadcast %cst_5 : f32 to vector<64x64xf32>
    %7 = arith.mulf %6, %5 : vector<64x64xf32>
    %8 = arith.maximumf %5, %7 : vector<64x64xf32>
    %c0_6 = arith.constant 0 : index
    %c0_7 = arith.constant 0 : index
    %9 = vector.load %arg4[%c0_6, %c0_7] : memref<64x32xf32, #tpu.memory_space<vmem>>, vector<64x32xf32>
    %cst_8 = arith.constant dense<0.000000e+00> : vector<64x32xf32>
    %10 = tpu.matmul %8, %9, %cst_8 {dimension_numbers = #tpu.dot_dimension_numbers<[1], [0], [0], [1], [0, 0, 1, 1], [], []>} : vector<64x64xf32>, vector<64x32xf32>, vector<64x32xf32> -> vector<64x32xf32>
    %c0_9 = arith.constant 0 : index
    %c0_10 = arith.constant 0 : index
    %11 = vector.load %arg5[%c0_9, %c0_10] : memref<1x32xf32, #tpu.memory_space<vmem>>, vector<1x32xf32>
    %12 = vector.broadcast %11 : vector<1x32xf32> to vector<64x32xf32>
    %13 = arith.addf %10, %12 : vector<64x32xf32>
    %c0_11 = arith.constant 0 : index
    %c0_12 = arith.constant 0 : index
    %14 = vector.load %arg6[%c0_11, %c0_12] : memref<64x32xf32, #tpu.memory_space<vmem>>, vector<64x32xf32>
    tpu.vector_store %arg6[%c0_11, %c0_12], %13 {strides = array<i32>} : memref<64x32xf32, #tpu.memory_space<vmem>>, vector<64x32xf32>,
    return
  }
  func.func @transform_0(%arg0: i32) -> (i32, i32) {
    %c0_i32 = arith.constant 0 : i32
    %c0_i32_0 = arith.constant 0 : i32
    return %arg0, %c0_i32 : i32, i32
  }
  func.func @transform_1(%arg0: i32) -> (i32, i32) {
    %c0_i32 = arith.constant 0 : i32
    %c0_i32_0 = arith.constant 0 : i32
    %c0_i32_1 = arith.constant 0 : i32
    return %c0_i32, %c0_i32_0 : i32, i32
  }
  func.func @transform_2(%arg0: i32) -> (i32, i32) {
    %c0_i32 = arith.constant 0 : i32
    %c0_i32_0 = arith.constant 0 : i32
    %c0_i32_1 = arith.constant 0 : i32
    return %c0_i32, %c0_i32_0 : i32, i32
  }
  func.func @transform_3(%arg0: i32) -> (i32, i32) {
    %c0_i32 = arith.constant 0 : i32
    %c0_i32_0 = arith.constant 0 : i32
    %c0_i32_1 = arith.constant 0 : i32
    return %c0_i32, %c0_i32_0 : i32, i32
  }
  func.func @transform_4(%arg0: i32) -> (i32, i32) {
    %c0_i32 = arith.constant 0 : i32
    %c0_i32_0 = arith.constant 0 : i32
    %c0_i32_1 = arith.constant 0 : i32
    return %c0_i32, %c0_i32_0 : i32, i32
  }
  func.func @transform_5(%arg0: i32) -> (i32, i32) {
    %c0_i32 = arith.constant 0 : i32
    %c0_i32_0 = arith.constant 0 : i32
    return %arg0, %c0_i32 : i32, i32
  }
}

</mosaic_0001>

<llo_original>
// kernel: feedforward.1
$region0: #{feedforward.1}
  #allocation0 [shape = 'u32[]', space=smem, size = 0x4, offset = 0x4, fixed_abs, tag = 'smem constant byte address 0x4 - core index']
  #allocation1 [shape = 'u32[144,128]{1,0:T(1,128)}', space=vmem, size = 0x12000, scoped, tag = 'internal scratch']
  %s0 = inlined_call_operand.vmem [shape: f32[64,32], index: 0, kind: input, shape index: {}]
  %s1 = inlined_call_operand.vmem [shape: f32[32,64], index: 1, kind: input, shape index: {}]
  %s2 = inlined_call_operand.vmem [shape: f32[1,64], index: 2, kind: input, shape index: {}]
  %s3 = inlined_call_operand.vmem [shape: f32[64,32], index: 3, kind: input, shape index: {}]
  %s4 = inlined_call_operand.vmem [shape: f32[1,32], index: 4, kind: input, shape index: {}]
  %s5 = inlined_call_operand.hbm [shape: f32[64,32], index: 5, kind: output, shape index: {}]
  %s6 = sld [smem:[#allocation0]]
  $region30: #{feedforward.1} parent=0
    _
  %s8 = ssub.s32 1, %s6
  %s9 = scalar_select 0, %s8, %s6
  $region1: #{feedforward.1} parent=0
    #allocation2 [shape = 'u8[32768]{0}', space=vmem, size = 0x8000, scoped, tag = 'output window, operand 0, single buffered']
    #allocation3 [shape = 's32[1]{0}', space=sflag, size = 0x4, scoped, tag = 'scoped memory for feedforward.1']
    %10 = vsyncpa [#allocation3], 0
    // Predicated region
    $region2: #{feedforward.1} parent=1 // pred_check
      _
    $region3: #{feedforward.1} parent=1 // pred_check_branch
      %12 = sbr.rel (0) target = $region5
    $region4: #{feedforward.1} parent=1 // pred_region
      _
    $region5: #{feedforward.1} parent=1 // pred_fallthru
      _
    // Predicated region
    $region6: #{feedforward.1} parent=1 // pred_check
      _
    $region7: #{feedforward.1} parent=1 // pred_check_branch
      %14 = sbr.rel (0) target = $region9
    $region8: #{feedforward.1} parent=1 // pred_region
      _
    $region9: #{feedforward.1} parent=1 // pred_fallthru
      _
    // Predicated region
    $region10: #{feedforward.1} parent=1 // pred_check
      _
    $region11: #{feedforward.1} parent=1 // pred_check_branch
      %16 = sbr.rel (0) target = $region13
    $region12: #{feedforward.1} parent=1 // pred_region
      _
    $region13: #{feedforward.1} parent=1 // pred_fallthru
      _
    // Predicated region
    $region14: #{feedforward.1} parent=1 // pred_check
      _
    $region15: #{feedforward.1} parent=1 // pred_check_branch
      %18 = sbr.rel (0) target = $region17
    $region16: #{feedforward.1} parent=1 // pred_region
      _
    $region17: #{feedforward.1} parent=1 // pred_fallthru
      _
    // Predicated region
    $region18: #{feedforward.1} parent=1 // pred_check
      _
    $region19: #{feedforward.1} parent=1 // pred_check_branch
      %20 = sbr.rel (0) target = $region21
    $region20: #{feedforward.1} parent=1 // pred_region
      _
    $region21: #{feedforward.1} parent=1 // pred_fallthru
      _
    %v21 = vld [vmem:[%s0] sm:$0xff]
    %v22 = vld [vmem:[%s0 + $0x8] sm:$0xff]
    %v23 = vld [vmem:[%s0 + $0x10] sm:$0xff]
    %v24 = vld [vmem:[%s0 + $0x18] sm:$0xff]
    %v25 = vld [vmem:[%s0 + $0x20] sm:$0xff]
    %v26 = vld [vmem:[%s0 + $0x28] sm:$0xff]
    %v27 = vld [vmem:[%s0 + $0x30] sm:$0xff]
    %v28 = vld [vmem:[%s0 + $0x38] sm:$0xff]
    %v29 = vld [vmem:[%s1] sm:$0xff]
    %v30 = vld [vmem:[%s1 + $0x8] sm:$0xff]
    %v31 = vld [vmem:[%s1 + $0x10] sm:$0xff]
    %v32 = vld [vmem:[%s1 + $0x18] sm:$0xff]
    %v33 = vld [vmem:[%s2] sm:$0x1]
    %v35 = vlaneseq
    %v36 = vshrl.u32 %v35, 7
    %v37 = vsub.s32 0, %v36
    %v38 = vrot.slane %v33, %v37
    %vm40 = vcmask 261120
    %v42 = vsel %vm40, %v21, 0
    %v45 = vsel %vm40, %v22, 0
    %v48 = vsel %vm40, %v23, 0
    %v51 = vsel %vm40, %v24, 0
    %v54 = vsel %vm40, %v25, 0
    %v57 = vsel %vm40, %v26, 0
    %v60 = vsel %vm40, %v27, 0
    %v63 = vsel %vm40, %v28, 0
    %65 = vmatprep.subr.mxu0 0.0
    %66 = vmatpush1.msra.mxu0 0.0
    %67 = vmatprep.subr.mxu0 0.0
    %68 = vmatpush1.msra.mxu0 0.0
    %69 = vmatprep.subr.mxu0 0.0
    %70 = vmatpush1.msra.mxu0 0.0
    %71 = vmatprep.subr.mxu0 0.0
    %72 = vmatpush1.msra.mxu0 0.0
    %73 = vmatprep.subr.mxu0 0.0
    %74 = vmatpush1.msra.mxu0 0.0
    %75 = vmatprep.subr.mxu0 0.0
    %76 = vmatpush1.msra.mxu0 0.0
    %77 = vmatprep.subr.mxu0 0.0
    %78 = vmatpush1.msra.mxu0 0.0
    %79 = vmatprep.subr.mxu0 0.0
    %80 = vmatpush1.msra.mxu0 0.0
    %81 = vmatprep.subr.mxu0 0.0
    %82 = vmatpush1.msra.mxu0 0.0
    %83 = vmatprep.subr.mxu0 0.0
    %84 = vmatpush1.msra.mxu0 0.0
    %85 = vmatprep.subr.mxu0 0.0
    %86 = vmatpush1.msra.mxu0 0.0
    %87 = vmatprep.subr.mxu0 0.0
    %88 = vmatpush1.msra.mxu0 0.0
    %89 = vmatprep.subr.mxu0 0.0
    %90 = vmatpush1.msra.mxu0 %v32
    %91 = vmatprep.subr.mxu0 0.0
    %92 = vmatpush1.msra.mxu0 %v31
    %93 = vmatprep.subr.mxu0 0.0
    %94 = vmatpush1.msra.mxu0 %v30
    %95 = vmatprep.subr.mxu0 0.0
    %96 = vmatpush1.msra.mxu0 %v29
    %97 = vmatprep.subr.mxu0 0.0
    %98 = vmatpush2.msra.mxu0 0.0
    %99 = vmatprep.subr.mxu0 0.0
    %100 = vmatpush2.msra.mxu0 0.0
    %101 = vmatprep.subr.mxu0 0.0
    %102 = vmatpush2.msra.mxu0 0.0
    %103 = vmatprep.subr.mxu0 0.0
    %104 = vmatpush2.msra.mxu0 0.0
    %105 = vmatprep.subr.mxu0 0.0
    %106 = vmatpush2.msra.mxu0 0.0
    %107 = vmatprep.subr.mxu0 0.0
    %108 = vmatpush2.msra.mxu0 0.0
    %109 = vmatprep.subr.mxu0 0.0
    %110 = vmatpush2.msra.mxu0 0.0
    %111 = vmatprep.subr.mxu0 0.0
    %112 = vmatpush2.msra.mxu0 0.0
    %113 = vmatprep.subr.mxu0 0.0
    %114 = vmatpush2.msra.mxu0 0.0
    %115 = vmatprep.subr.mxu0 0.0
    %116 = vmatpush2.msra.mxu0 0.0
    %117 = vmatprep.subr.mxu0 0.0
    %118 = vmatpush2.msra.mxu0 0.0
    %119 = vmatprep.subr.mxu0 0.0
    %120 = vmatpush2.msra.mxu0 0.0
    %121 = vmatprep.subr.mxu0 0.0
    %122 = vmatpush2.msra.mxu0 0.0
    %123 = vmatprep.subr.mxu0 0.0
    %124 = vmatpush2.msra.mxu0 0.0
    %125 = vmatprep.subr.mxu0 0.0
    %126 = vmatpush2.msra.mxu0 0.0
    %127 = vmatprep.subr.mxu0 0.0
    %128 = vmatpush2.msra.mxu0 0.0
    %129 = vmatprep.mubr.f32.mxu0 0.0
    %130 = vmatmul.mubr.f32.gmra.mxu0 %v42
    %v131 = vpop.f32.mrf.mxu0
    %v132 = vadd.f32 %v38, %v131
    %v133 = vpop.f32.mrf.mxu0
    %134 = vmatprep.mubr.f32.mxu0 0.0
    %135 = vmatmul.mubr.f32.gmra.mxu0 %v45
    %v136 = vpop.f32.mrf.mxu0
    %v137 = vadd.f32 %v38, %v136
    %v138 = vpop.f32.mrf.mxu0
    %139 = vmatprep.mubr.f32.mxu0 0.0
    %140 = vmatmul.mubr.f32.gmra.mxu0 %v48
    %v141 = vpop.f32.mrf.mxu0
    %v142 = vadd.f32 %v38, %v141
    %v143 = vpop.f32.mrf.mxu0
    %144 = vmatprep.mubr.f32.mxu0 0.0
    %145 = vmatmul.mubr.f32.gmra.mxu0 %v51
    %v146 = vpop.f32.mrf.mxu0
    %v147 = vadd.f32 %v38, %v146
    %v148 = vpop.f32.mrf.mxu0
    %149 = vmatprep.mubr.f32.mxu0 0.0
    %150 = vmatmul.mubr.f32.gmra.mxu0 %v54
    %v151 = vpop.f32.mrf.mxu0
    %v152 = vadd.f32 %v38, %v151
    %v153 = vpop.f32.mrf.mxu0
    %154 = vmatprep.mubr.f32.mxu0 0.0
    %155 = vmatmul.mubr.f32.gmra.mxu0 %v57
    %v156 = vpop.f32.mrf.mxu0
    %v157 = vadd.f32 %v38, %v156
    %v158 = vpop.f32.mrf.mxu0
    %159 = vmatprep.mubr.f32.mxu0 0.0
    %160 = vmatmul.mubr.f32.gmra.mxu0 %v60
    %v161 = vpop.f32.mrf.mxu0
    %v162 = vadd.f32 %v38, %v161
    %v163 = vpop.f32.mrf.mxu0
    %164 = vmatprep.mubr.f32.mxu0 0.0
    %165 = vmatmul.mubr.f32.gmra.mxu0 %v63
    %v166 = vpop.f32.mrf.mxu0
    %v167 = vadd.f32 %v38, %v166
    %v168 = vpop.f32.mrf.mxu0
    %169 = vdwg.mxu0
    %v170 = vmul.f32 %v132, 0.2
    %v171 = vmul.f32 %v137, 0.2
    %v172 = vmul.f32 %v142, 0.2
    %v173 = vmul.f32 %v147, 0.2
    %v174 = vmul.f32 %v152, 0.2
    %v175 = vmul.f32 %v157, 0.2
    %v176 = vmul.f32 %v162, 0.2
    %v177 = vmul.f32 %v167, 0.2
    %v178 = vmax.f32 %v132, %v170
    %v179 = vmax.f32 %v137, %v171
    %v180 = vmax.f32 %v142, %v172
    %v181 = vmax.f32 %v147, %v173
    %v182 = vmax.f32 %v152, %v174
    %v183 = vmax.f32 %v157, %v175
    %v184 = vmax.f32 %v162, %v176
    %v185 = vmax.f32 %v167, %v177
    %v186 = vld [vmem:[%s3] sm:$0xff]
    %v187 = vld [vmem:[%s3 + $0x8] sm:$0xff]
    %v188 = vld [vmem:[%s3 + $0x10] sm:$0xff]
    %v189 = vld [vmem:[%s3 + $0x18] sm:$0xff]
    %v190 = vld [vmem:[%s3 + $0x20] sm:$0xff]
    %v191 = vld [vmem:[%s3 + $0x28] sm:$0xff]
    %v192 = vld [vmem:[%s3 + $0x30] sm:$0xff]
    %v193 = vld [vmem:[%s3 + $0x38] sm:$0xff]
    %v194 = vld [vmem:[%s4] sm:$0x1]
    %v196 = vlaneseq
    %v197 = vshrl.u32 %v196, 7
    %v198 = vsub.s32 0, %v197
    %v199 = vrot.slane %v194, %v198
    %vm201 = vcmask 523264
    %v203 = vsel %vm201, %v178, 0
    %v206 = vsel %vm201, %v179, 0
    %v209 = vsel %vm201, %v180, 0
    %v212 = vsel %vm201, %v181, 0
    %v215 = vsel %vm201, %v182, 0
    %v218 = vsel %vm201, %v183, 0
    %v221 = vsel %vm201, %v184, 0
    %v224 = vsel %vm201, %v185, 0
    %226 = vmatprep.subr.mxu0 0.0
    %227 = vmatpush1.msra.mxu0 0.0
    %228 = vmatprep.subr.mxu0 0.0
    %229 = vmatpush1.msra.mxu0 0.0
    %230 = vmatprep.subr.mxu0 0.0
    %231 = vmatpush1.msra.mxu0 0.0
    %232 = vmatprep.subr.mxu0 0.0
    %233 = vmatpush1.msra.mxu0 0.0
    %234 = vmatprep.subr.mxu0 0.0
    %235 = vmatpush1.msra.mxu0 0.0
    %236 = vmatprep.subr.mxu0 0.0
    %237 = vmatpush1.msra.mxu0 0.0
    %238 = vmatprep.subr.mxu0 0.0
    %239 = vmatpush1.msra.mxu0 0.0
    %240 = vmatprep.subr.mxu0 0.0
    %241 = vmatpush1.msra.mxu0 0.0
    %242 = vmatprep.subr.mxu0 0.0
    %243 = vmatpush1.msra.mxu0 %v193
    %244 = vmatprep.subr.mxu0 0.0
    %245 = vmatpush1.msra.mxu0 %v192
    %246 = vmatprep.subr.mxu0 0.0
    %247 = vmatpush1.msra.mxu0 %v191
    %248 = vmatprep.subr.mxu0 0.0
    %249 = vmatpush1.msra.mxu0 %v190
    %250 = vmatprep.subr.mxu0 0.0
    %251 = vmatpush1.msra.mxu0 %v189
    %252 = vmatprep.subr.mxu0 0.0
    %253 = vmatpush1.msra.mxu0 %v188
    %254 = vmatprep.subr.mxu0 0.0
    %255 = vmatpush1.msra.mxu0 %v187
    %256 = vmatprep.subr.mxu0 0.0
    %257 = vmatpush1.msra.mxu0 %v186
    %258 = vmatprep.subr.mxu0 0.0
    %259 = vmatpush2.msra.mxu0 0.0
    %260 = vmatprep.subr.mxu0 0.0
    %261 = vmatpush2.msra.mxu0 0.0
    %262 = vmatprep.subr.mxu0 0.0
    %263 = vmatpush2.msra.mxu0 0.0
    %264 = vmatprep.subr.mxu0 0.0
    %265 = vmatpush2.msra.mxu0 0.0
    %266 = vmatprep.subr.mxu0 0.0
    %267 = vmatpush2.msra.mxu0 0.0
    %268 = vmatprep.subr.mxu0 0.0
    %269 = vmatpush2.msra.mxu0 0.0
    %270 = vmatprep.subr.mxu0 0.0
    %271 = vmatpush2.msra.mxu0 0.0
    %272 = vmatprep.subr.mxu0 0.0
    %273 = vmatpush2.msra.mxu0 0.0
    %274 = vmatprep.subr.mxu0 0.0
    %275 = vmatpush2.msra.mxu0 0.0
    %276 = vmatprep.subr.mxu0 0.0
    %277 = vmatpush2.msra.mxu0 0.0
    %278 = vmatprep.subr.mxu0 0.0
    %279 = vmatpush2.msra.mxu0 0.0
    %280 = vmatprep.subr.mxu0 0.0
    %281 = vmatpush2.msra.mxu0 0.0
    %282 = vmatprep.subr.mxu0 0.0
    %283 = vmatpush2.msra.mxu0 0.0
    %284 = vmatprep.subr.mxu0 0.0
    %285 = vmatpush2.msra.mxu0 0.0
    %286 = vmatprep.subr.mxu0 0.0
    %287 = vmatpush2.msra.mxu0 0.0
    %288 = vmatprep.subr.mxu0 0.0
    %289 = vmatpush2.msra.mxu0 0.0
    %290 = vmatprep.mubr.f32.mxu0 0.0
    %291 = vmatmul.mubr.f32.gmra.mxu0 %v203
    %v292 = vpop.f32.mrf.mxu0
    %v293 = vadd.f32 %v199, %v292
    %v294 = vpop.f32.mrf.mxu0
    %295 = vmatprep.mubr.f32.mxu0 0.0
    %296 = vmatmul.mubr.f32.gmra.mxu0 %v206
    %v297 = vpop.f32.mrf.mxu0
    %v298 = vadd.f32 %v199, %v297
    %v299 = vpop.f32.mrf.mxu0
    %300 = vmatprep.mubr.f32.mxu0 0.0
    %301 = vmatmul.mubr.f32.gmra.mxu0 %v209
    %v302 = vpop.f32.mrf.mxu0
    %v303 = vadd.f32 %v199, %v302
    %v304 = vpop.f32.mrf.mxu0
    %305 = vmatprep.mubr.f32.mxu0 0.0
    %306 = vmatmul.mubr.f32.gmra.mxu0 %v212
    %v307 = vpop.f32.mrf.mxu0
    %v308 = vadd.f32 %v199, %v307
    %v309 = vpop.f32.mrf.mxu0
    %310 = vmatprep.mubr.f32.mxu0 0.0
    %311 = vmatmul.mubr.f32.gmra.mxu0 %v215
    %v312 = vpop.f32.mrf.mxu0
    %v313 = vadd.f32 %v199, %v312
    %v314 = vpop.f32.mrf.mxu0
    %315 = vmatprep.mubr.f32.mxu0 0.0
    %316 = vmatmul.mubr.f32.gmra.mxu0 %v218
    %v317 = vpop.f32.mrf.mxu0
    %v318 = vadd.f32 %v199, %v317
    %v319 = vpop.f32.mrf.mxu0
    %320 = vmatprep.mubr.f32.mxu0 0.0
    %321 = vmatmul.mubr.f32.gmra.mxu0 %v221
    %v322 = vpop.f32.mrf.mxu0
    %v323 = vadd.f32 %v199, %v322
    %v324 = vpop.f32.mrf.mxu0
    %325 = vmatprep.mubr.f32.mxu0 0.0
    %326 = vmatmul.mubr.f32.gmra.mxu0 %v224
    %v327 = vpop.f32.mrf.mxu0
    %v328 = vadd.f32 %v199, %v327
    %v329 = vpop.f32.mrf.mxu0
    %330 = vdwg.mxu0
    %331 = vst.msk [vmem:[#allocation2] sm:$0xff] %vm40, %v293
    %332 = vst.msk [vmem:[#allocation2 + $0x8] sm:$0xff] %vm40, %v298
    %333 = vst.msk [vmem:[#allocation2 + $0x10] sm:$0xff] %vm40, %v303
    %334 = vst.msk [vmem:[#allocation2 + $0x18] sm:$0xff] %vm40, %v308
    %335 = vst.msk [vmem:[#allocation2 + $0x20] sm:$0xff] %vm40, %v313
    %336 = vst.msk [vmem:[#allocation2 + $0x28] sm:$0xff] %vm40, %v318
    %337 = vst.msk [vmem:[#allocation2 + $0x30] sm:$0xff] %vm40, %v323
    %338 = vst.msk [vmem:[#allocation2 + $0x38] sm:$0xff] %vm40, %v328
    // Predicated region
    $region22: #{feedforward.1} parent=1 // pred_check
      _
    $region23: #{feedforward.1} parent=1 // pred_check_branch
      %340 = sbr.rel (0) target = $region25
    $region24: #{feedforward.1} parent=1 // pred_region
      %s342 = ssub.s32 1024, 1024
      %343 = vsyncadd [#allocation3], %s342
      %s344 = sshll.u32 [#allocation2], 4
      %s345 = int_to_ptr.vmem [resolvable:$true] %s344
      %350 = dma.vmem_to_hbm [thread:$0]  %s345, 1024, %s5, [#allocation3], 128, 128, 8
    $region25: #{feedforward.1} parent=1 // pred_fallthru
      _
    // Predicated region
    $region26: #{feedforward.1} parent=1 // pred_check
      _
    $region27: #{feedforward.1} parent=1 // pred_check_branch
      %352 = sbr.rel (0) target = $region29
    $region28: #{feedforward.1} parent=1 // pred_region
      %353 = dma.done [#allocation3], 1024
    $region29: #{feedforward.1} parent=1 // pred_fallthru
      _
    %354 = vsyncpa [#allocation3], 1

</llo_original>
